<compile_context>
chip_gen: v7x
topology: tpu7x:2x2x1
jax: 0.10.0
libtpu: 0.0.40
codegen_flags: <defaults>
</compile_context>

<pallas_src>
import functools

import jax
import jax.numpy as jnp
from jax.experimental import pallas as pl
from jax.experimental.pallas import tpu as pltpu


# ----------------------------- Pallas kernel -------------------------------

def _conv_gemm_kernel(lhs_ref, w_ref, b_ref, o_ref):
    """Whole conv as one MXU GEMM + bias add.

    lhs_ref: (B*Ho, kh*Wp*C)  bf16  row-shifted, (W, C)-folded input windows
    w_ref:   (kh*Wp*C, Wo*OC) bf16  banded weight (kw shifts + C folded in)
    b_ref:   (1, Wo*OC)       f32   bias broadcast over Wo
    o_ref:   (B*Ho, Wo*OC)    f32   lane-dense output
    """
    acc = jnp.dot(lhs_ref[...], w_ref[...], preferred_element_type=jnp.float32)
    o_ref[...] = (acc + b_ref[...]).astype(o_ref.dtype)


def fused_conv_gemm(lhs, w_stack, b_row):
    """lhs: (M, K); w_stack: (K, N); b_row: (1, N) -> (M, N) f32."""
    M, K = lhs.shape
    _, N = w_stack.shape
    flops = 2 * M * K * N                      # actual MXU work (unpadded dims)
    bytes_accessed = (lhs.size * lhs.dtype.itemsize
                      + w_stack.size * w_stack.dtype.itemsize
                      + b_row.size * b_row.dtype.itemsize
                      + M * N * 4)
    return pl.pallas_call(
        _conv_gemm_kernel,
        out_shape=jax.ShapeDtypeStruct((M, N), jnp.float32),
        grid_spec=pl.GridSpec(
            grid=(1,),                          # single program: one weight fetch
            in_specs=[
                pl.BlockSpec((M, K), lambda i: (0, 0)),
                pl.BlockSpec((K, N), lambda i: (0, 0)),
                pl.BlockSpec((1, N), lambda i: (0, 0)),
            ],
            out_specs=pl.BlockSpec((M, N), lambda i: (0, 0)),
        ),
        compiler_params=pltpu.CompilerParams(
            dimension_semantics=("arbitrary",)),
        cost_estimate=pl.CostEstimate(flops=flops, transcendentals=0,
                                      bytes_accessed=bytes_accessed),
    )(lhs, w_stack, b_row)


# -------------------- per-layer weight prep (hoisted, once) ----------------

def prepare_conv_layer(weight, bias, H, W, padding,
                       compute_dtype=jnp.bfloat16):
    """Build the banded GEMM weight + tiled bias once per layer.

    Banded weight:  w_stack[i*Wp*C + wj*C + c, wo*OC + oc] = weight[oc, c, i, wj-wo]
    when 0 <= wj - wo < kw, else 0 — folds the kw lane shifts and the channel
    contraction into the weight so the conv becomes a single GEMM.
    """
    OC, C, kh, kw = weight.shape
    Wp = W + 2 * padding
    Wo = Wp - kw + 1
    K = Wp * C
    w_hwio = jnp.transpose(weight, (2, 3, 1, 0)).astype(jnp.float32)  # (kh,kw,C,OC)
    wo_idx = jnp.arange(Wo)
    band = jnp.zeros((kh, Wp, Wo, C, OC), jnp.float32)
    for i in range(kh):
        for j in range(kw):
            band = band.at[i, wo_idx + j, wo_idx].set(w_hwio[i, j])
    w_stack = band.transpose(0, 1, 3, 2, 4).reshape(kh * K, Wo * OC)
    w_stack = w_stack.astype(compute_dtype)
    b_row = jnp.tile(bias.astype(jnp.float32), Wo).reshape(1, Wo * OC)
    return jax.block_until_ready(w_stack), jax.block_until_ready(b_row)


# ------------------------- Conv2d forward (hot path) -----------------------

@functools.partial(jax.jit,
                   static_argnames=("kernel_size", "padding", "out_channels"))
def conv2d_apply(x, w_stack, b_row, *, kernel_size, padding, out_channels):
    """x: (B, C, H, W) NCHW f32 -> (B, OC, Ho, Wo) NCHW f32."""
    # TODO(synk): general stride / dilation / groups (synthetic model is s=1, d=1, g=1).
    kh, kw = kernel_size
    B, C, H, W = x.shape
    Hp, Wp = H + 2 * padding, W + 2 * padding
    Ho, Wo = Hp - kh + 1, Wp - kw + 1

    # NCHW -> NHWC once, pad spatially, fold (W, C) into the lane axis.
    x_nhwc = jnp.transpose(x, (0, 2, 3, 1))
    xp = jnp.pad(x_nhwc,
                 ((0, 0), (padding, padding), (padding, padding), (0, 0)))
    x2 = xp.reshape(B, Hp, Wp * C)                       # (B, Hp, K)

    # Stack the kh row-shifted windows along K and fold batch into M.
    windows = jnp.stack([x2[:, i:i + Ho, :] for i in range(kh)], axis=2)
    lhs = windows.reshape(B * Ho, kh * Wp * C).astype(jnp.bfloat16)

    out2 = fused_conv_gemm(lhs, w_stack, b_row)          # (B*Ho, Wo*OC) f32
    return out2.reshape(B, Ho, Wo, out_channels).transpose(0, 3, 1, 2)


# ----------------------- VerboseExecution equivalent -----------------------

class VerboseExecutionJax:
    """Mirrors the hook-based shape recording and forward of VerboseExecution."""

    def __init__(self, conv_params, model_name, dims, input_size):
        self.conv_params = conv_params  # dict of name -> (weight, bias, meta)
        self.model_name = model_name
        self.dims = dims
        self.input_size = input_size

        # Hoisted per-layer weight prep (built once, NOT per forward call).
        self._prepared = {}
        _, C, H, W = input_size
        cur = (C, H, W)
        for name, (w, b, meta) in conv_params.items():
            assert meta["stride"] == 1, "synthetic model uses stride 1"
            OC, _, kh, kw = w.shape
            pad = meta["padding"]
            self._prepared[name] = prepare_conv_layer(w, b, cur[1], cur[2], pad)
            cur = (OC, cur[1] + 2 * pad - kh + 1, cur[2] + 2 * pad - kw + 1)

        # Mimic the __init__ dry-run with a random input to populate `dims`.
        probe = jax.random.uniform(jax.random.PRNGKey(1), input_size,
                                   dtype=jnp.float32)
        _ = jax.block_until_ready(self.forward(probe))

    def _record(self, name, inp_shape, out_shape, meta):
        kh, kw = meta["kernel_size"]
        pad = meta["padding"]
        key = f"{','.join(str(x) for x in (1, *inp_shape[1:]))}_"
        key += f"{','.join(str(x) for x in (1, *out_shape[1:]))}_"
        key += (f"{kh},{kw}-{pad},{pad},{pad},{pad}-"
                f"{meta['stride']},{meta['stride']}-1,1-1-False_")
        key += "True" if meta["has_bias"] else "False"
        self.dims.setdefault(key, []).append(self.model_name + "." + name)

    def forward(self, x):
        h = x
        for name, (w, b, meta) in self.conv_params.items():
            w_stack, b_row = self._prepared[name]
            out = conv2d_apply(h, w_stack, b_row,
                               kernel_size=meta["kernel_size"],
                               padding=meta["padding"],
                               out_channels=w.shape[0])
            self._record(name, h.shape, out.shape, meta)
            h = out
        return h


# --------------------------------- main ------------------------------------

if __name__ == "__main__":
    B, C, H, W = 2, 4, 16, 16
    OC, KH, KW = 8, 3, 3

    key = jax.random.PRNGKey(0)
    kw_, kb_, kx_ = jax.random.split(key, 3)
    weight = jax.random.normal(kw_, (OC, C, KH, KW), dtype=jnp.float32) * 0.1
    bias = jax.random.normal(kb_, (OC,), dtype=jnp.float32) * 0.1
    x = jax.random.normal(kx_, (B, C, H, W), dtype=jnp.float32)

    conv_params = {
        "conv1": (weight, bias,
                  {"kernel_size": (KH, KW), "stride": 1, "padding": 1,
                   "has_bias": True}),
    }
    dims = {}
    model = VerboseExecutionJax(conv_params, "synthetic_model", dims,
                                input_size=(B, C, H, W))

    out = jax.block_until_ready(model.forward(x))

    # Reference check with XLA's native conv (NCHW).  Tolerance loosened for
    # the bf16 operand cast (f32 accumulation is kept inside the kernel).
    ref = jax.lax.conv_general_dilated(
        x, weight, window_strides=(1, 1), padding=((1, 1), (1, 1)),
        dimension_numbers=("NCHW", "OIHW", "NCHW")) + bias[None, :, None, None]
    assert out.shape == (B, OC, H, W)
    assert jnp.allclose(out, ref, atol=2e-2, rtol=2e-2), \
        float(jnp.max(jnp.abs(out - ref)))
    assert len(dims) == 1 and list(dims.values())[0][0].endswith(".conv1")

    print("KERNEL_OK")
</pallas_src>

<mosaic_0001>
module attributes {stable_mosaic.version = 11 : i64} {
  func.func @_conv_gemm_kernel(%arg0: i32, %arg1: memref<32x216xbf16, #tpu.memory_space<vmem>>, %arg2: memref<216x128xbf16, #tpu.memory_space<vmem>>, %arg3: memref<1x128xf32, #tpu.memory_space<vmem>>, %arg4: memref<32x128xf32, #tpu.memory_space<vmem>>) attributes {dimension_semantics = [#tpu.dimension_semantics<arbitrary>], iteration_bounds = array<i64: 1>, scalar_prefetch = 0 : i64, scratch_operands = 0 : i64, tpu.core_type = #tpu.core_type<tc>, window_params = [{pipeline_mode = #tpu.pipeline_mode<synchronous>, transform_indices = @transform_0, window_bounds = array<i64: 32, 216>}, {pipeline_mode = #tpu.pipeline_mode<synchronous>, transform_indices = @transform_1, window_bounds = array<i64: 216, 128>}, {pipeline_mode = #tpu.pipeline_mode<synchronous>, transform_indices = @transform_2, window_bounds = array<i64: 1, 128>}, {pipeline_mode = #tpu.pipeline_mode<synchronous>, transform_indices = @transform_3, window_bounds = array<i64: 32, 128>}]} {
    %c0 = arith.constant 0 : index
    %c0_0 = arith.constant 0 : index
    %0 = vector.load %arg1[%c0, %c0_0] : memref<32x216xbf16, #tpu.memory_space<vmem>>, vector<32x216xbf16>
    %c0_1 = arith.constant 0 : index
    %c0_2 = arith.constant 0 : index
    %1 = vector.load %arg2[%c0_1, %c0_2] : memref<216x128xbf16, #tpu.memory_space<vmem>>, vector<216x128xbf16>
    %cst = arith.constant dense<0.000000e+00> : vector<32x128xf32>
    %2 = tpu.matmul %0, %1, %cst {dimension_numbers = #tpu.dot_dimension_numbers<[1], [0], [0], [1], [0, 0, 1, 1], [], []>} : vector<32x216xbf16>, vector<216x128xbf16>, vector<32x128xf32> -> vector<32x128xf32>
    %c0_3 = arith.constant 0 : index
    %c0_4 = arith.constant 0 : index
    %3 = vector.load %arg3[%c0_3, %c0_4] : memref<1x128xf32, #tpu.memory_space<vmem>>, vector<1x128xf32>
    %4 = vector.broadcast %3 : vector<1x128xf32> to vector<32x128xf32>
    %5 = arith.addf %2, %4 : vector<32x128xf32>
    %c0_5 = arith.constant 0 : index
    %c0_6 = arith.constant 0 : index
    %6 = vector.load %arg4[%c0_5, %c0_6] : memref<32x128xf32, #tpu.memory_space<vmem>>, vector<32x128xf32>
    tpu.vector_store %arg4[%c0_5, %c0_6], %5 {strides = array<i32>} : memref<32x128xf32, #tpu.memory_space<vmem>>, vector<32x128xf32>,
    return
  }
  func.func @transform_0(%arg0: i32) -> (i32, i32) {
    %c0_i32 = arith.constant 0 : i32
    %c0_i32_0 = arith.constant 0 : i32
    %c0_i32_1 = arith.constant 0 : i32
    return %c0_i32, %c0_i32_0 : i32, i32
  }
  func.func @transform_1(%arg0: i32) -> (i32, i32) {
    %c0_i32 = arith.constant 0 : i32
    %c0_i32_0 = arith.constant 0 : i32
    %c0_i32_1 = arith.constant 0 : i32
    return %c0_i32, %c0_i32_0 : i32, i32
  }
  func.func @transform_2(%arg0: i32) -> (i32, i32) {
    %c0_i32 = arith.constant 0 : i32
    %c0_i32_0 = arith.constant 0 : i32
    %c0_i32_1 = arith.constant 0 : i32
    return %c0_i32, %c0_i32_0 : i32, i32
  }
  func.func @transform_3(%arg0: i32) -> (i32, i32) {
    %c0_i32 = arith.constant 0 : i32
    %c0_i32_0 = arith.constant 0 : i32
    %c0_i32_1 = arith.constant 0 : i32
    return %c0_i32, %c0_i32_0 : i32, i32
  }
}

</mosaic_0001>

<llo_original>
// kernel: conv2d_apply.1
$region0: #{conv2d_apply.1}
  #allocation0 [shape = 'u32[]', space=smem, size = 0x4, offset = 0x4, fixed_abs, tag = 'smem constant byte address 0x4 - core index']
  #allocation1 [shape = 'u32[144,128]{1,0:T(1,128)}', space=vmem, size = 0x12000, scoped, tag = 'internal scratch']
  %s0 = inlined_call_operand.vmem [shape: bf16[32,216], index: 0, kind: input, shape index: {}]
  %s1 = inlined_call_operand.vmem [shape: bf16[216,128], index: 1, kind: input, shape index: {}]
  %s2 = inlined_call_operand.vmem [shape: f32[1,128], index: 2, kind: input, shape index: {}]
  %s3 = inlined_call_operand.vmem [shape: f32[32,128], index: 3, kind: output, shape index: {}]
  %s4 = sld [smem:[#allocation0]]
  $region22: #{conv2d_apply.1} parent=0
    _
  %s6 = ssub.s32 1, %s4
  %s7 = scalar_select 0, %s6, %s4
  // Predicated region
  $region2: #{conv2d_apply.1} parent=0 // pred_check
    _
  $region3: #{conv2d_apply.1} parent=0 // pred_check_branch
    %9 = sbr.rel (0) target = $region5
  $region4: #{conv2d_apply.1} parent=0 // pred_region
    _
  $region5: #{conv2d_apply.1} parent=0 // pred_fallthru
    _
  // Predicated region
  $region6: #{conv2d_apply.1} parent=0 // pred_check
    _
  $region7: #{conv2d_apply.1} parent=0 // pred_check_branch
    %11 = sbr.rel (0) target = $region9
  $region8: #{conv2d_apply.1} parent=0 // pred_region
    _
  $region9: #{conv2d_apply.1} parent=0 // pred_fallthru
    _
  // Predicated region
  $region10: #{conv2d_apply.1} parent=0 // pred_check
    _
  $region11: #{conv2d_apply.1} parent=0 // pred_check_branch
    %13 = sbr.rel (0) target = $region13
  $region12: #{conv2d_apply.1} parent=0 // pred_region
    _
  $region13: #{conv2d_apply.1} parent=0 // pred_fallthru
    _
  %v15 = vld [vmem:[%s0] sm:$0xff]
  %v16 = vld [vmem:[%s0 + $0x8] sm:$0xff]
  %v17 = vld [vmem:[%s0 + $0x10] sm:$0xff]
  %v18 = vld [vmem:[%s0 + $0x18] sm:$0xff]
  %v19 = vld [vmem:[%s1] sm:$0xf]
  %v20 = vld [vmem:[%s1 + $0x4] sm:$0xf]
  %v21 = vld [vmem:[%s1 + $0x8] sm:$0xf]
  %v22 = vld [vmem:[%s1 + $0xc] sm:$0xf]
  %v23 = vld [vmem:[%s1 + $0x10] sm:$0xf]
  %v24 = vld [vmem:[%s1 + $0x14] sm:$0xf]
  %v25 = vld [vmem:[%s1 + $0x18] sm:$0xf]
  %v26 = vld [vmem:[%s1 + $0x1c] sm:$0xf]
  %v27 = vld [vmem:[%s1 + $0x20] sm:$0xf]
  %v28 = vld [vmem:[%s1 + $0x24] sm:$0xf]
  %v29 = vld [vmem:[%s1 + $0x28] sm:$0xf]
  %v30 = vld [vmem:[%s1 + $0x2c] sm:$0xf]
  %v31 = vld [vmem:[%s1 + $0x30] sm:$0xf]
  %v32 = vld [vmem:[%s1 + $0x34] sm:$0xf]
  %v33 = vld [vmem:[%s1 + $0x38] sm:$0xf]
  %v34 = vld [vmem:[%s1 + $0x3c] sm:$0xf]
  %v35 = vld [vmem:[%s1 + $0x40] sm:$0xf]
  %v36 = vld [vmem:[%s1 + $0x44] sm:$0xf]
  %v37 = vld [vmem:[%s1 + $0x48] sm:$0xf]
  %v38 = vld [vmem:[%s1 + $0x4c] sm:$0xf]
  %v39 = vld [vmem:[%s1 + $0x50] sm:$0xf]
  %v40 = vld [vmem:[%s1 + $0x54] sm:$0xf]
  %v41 = vld [vmem:[%s1 + $0x58] sm:$0xf]
  %v42 = vld [vmem:[%s1 + $0x5c] sm:$0xf]
  %v43 = vld [vmem:[%s1 + $0x60] sm:$0xf]
  %v44 = vld [vmem:[%s1 + $0x64] sm:$0xf]
  %v45 = vld [vmem:[%s1 + $0x68] sm:$0xf]
  %v46 = vld [vmem:[%s2] sm:$0x1]
  %v48 = vlaneseq
  %v49 = vshrl.u32 %v48, 7
  %v50 = vsub.s32 0, %v49
  %v51 = vrot.slane %v46, %v50
  %v57 = vunpack.c.l.b16 %v15
  %v58 = vunpack.c.h.b16 %v15
  %v59 = vunpack.c.l.b16 %v16
  %v60 = vunpack.c.h.b16 %v16
  %v61 = vunpack.c.l.b16 %v17
  %v62 = vunpack.c.h.b16 %v17
  %v63 = vunpack.c.l.b16 %v18
  %v64 = vunpack.c.h.b16 %v18
  %v65 = vpack.c.b16 %v59, %v57
  %v66 = vpack.c.b16 %v60, %v58
  %v67 = vpack.c.b16 %v63, %v61
  %v68 = vpack.c.b16 %v64, %v62
  %v98 = vunpack.c.l.b16 %v19
  %v99 = vunpack.c.l.b16 %v20
  %v100 = vunpack.c.l.b16 %v21
  %v101 = vunpack.c.l.b16 %v22
  %v102 = vunpack.c.l.b16 %v23
  %v103 = vunpack.c.l.b16 %v24
  %v104 = vunpack.c.l.b16 %v25
  %v105 = vunpack.c.l.b16 %v26
  %v106 = vunpack.c.l.b16 %v27
  %v107 = vunpack.c.l.b16 %v28
  %v108 = vunpack.c.l.b16 %v29
  %v109 = vunpack.c.l.b16 %v30
  %v110 = vunpack.c.l.b16 %v31
  %v111 = vunpack.c.l.b16 %v32
  %v112 = vunpack.c.l.b16 %v33
  %v113 = vunpack.c.l.b16 %v34
  %v114 = vunpack.c.l.b16 %v35
  %v115 = vunpack.c.l.b16 %v36
  %v116 = vunpack.c.l.b16 %v37
  %v117 = vunpack.c.l.b16 %v38
  %v118 = vunpack.c.l.b16 %v39
  %v119 = vunpack.c.l.b16 %v40
  %v120 = vunpack.c.l.b16 %v41
  %v121 = vunpack.c.l.b16 %v42
  %v122 = vunpack.c.l.b16 %v43
  %v123 = vunpack.c.l.b16 %v44
  %v124 = vunpack.c.l.b16 %v45
  %v125 = vpack.c.b16 %v99, %v98
  %v126 = vpack.c.b16 %v101, %v100
  %v127 = vpack.c.b16 %v103, %v102
  %v128 = vpack.c.b16 %v105, %v104
  %v129 = vpack.c.b16 %v107, %v106
  %v130 = vpack.c.b16 %v109, %v108
  %v131 = vpack.c.b16 %v111, %v110
  %v132 = vpack.c.b16 %v113, %v112
  %v133 = vpack.c.b16 %v115, %v114
  %v134 = vpack.c.b16 %v117, %v116
  %v135 = vpack.c.b16 %v119, %v118
  %v136 = vpack.c.b16 %v121, %v120
  %v137 = vpack.c.b16 %v123, %v122
  %v138 = vpack.c.b16 %v124, %v124
  %vm152 = vcmask 719872
  %v154 = vsel %vm152, %v66, 0
  %v157 = vsel %vm152, %v68, 0
  %vm159 = vcmask 1043456
  %v161 = vsel %vm159, %v138, 0
  %163 = vmatprep.subr.bf16.mxu0 0
  %164 = vmatpush1.bf16.msra.mxu0 %v125
  %165 = vmatprep.subr.bf16.mxu0 0
  %166 = vmatpush1.bf16.msra.mxu0 %v126
  %167 = vmatprep.subr.bf16.mxu0 0
  %168 = vmatpush1.bf16.msra.mxu0 %v127
  %169 = vmatprep.subr.bf16.mxu0 0
  %170 = vmatpush1.bf16.msra.mxu0 %v128
  %171 = vmatprep.subr.bf16.mxu0 0
  %172 = vmatpush1.bf16.msra.mxu0 %v129
  %173 = vmatprep.subr.bf16.mxu0 0
  %174 = vmatpush1.bf16.msra.mxu0 %v130
  %175 = vmatprep.subr.bf16.mxu0 0
  %176 = vmatpush1.bf16.msra.mxu0 %v131
  %177 = vmatprep.subr.bf16.mxu0 0
  %178 = vmatpush1.bf16.msra.mxu0 %v132
  %179 = vmatprep.subr.bf16.mxu0 0
  %180 = vmatpush1.bf16.msra.mxu0 %v133
  %181 = vmatprep.subr.bf16.mxu0 0
  %182 = vmatpush1.bf16.msra.mxu0 %v134
  %183 = vmatprep.subr.bf16.mxu0 0
  %184 = vmatpush1.bf16.msra.mxu0 %v135
  %185 = vmatprep.subr.bf16.mxu0 0
  %186 = vmatpush1.bf16.msra.mxu0 %v136
  %187 = vmatprep.subr.bf16.mxu0 0
  %188 = vmatpush1.bf16.msra.mxu0 %v137
  %189 = vmatprep.subr.bf16.mxu0 0
  %190 = vmatpush1.bf16.msra.mxu0 %v161
  %191 = vmatprep.subr.bf16.mxu0 0
  %192 = vmatpush1.bf16.msra.mxu0 0
  %193 = vmatprep.subr.bf16.mxu0 0
  %194 = vmatpush1.bf16.msra.mxu0 0
  %195 = vmatprep.mubr.bf16.mxu0 %v154
  %196 = vmatmul.mubr.bf16.gmra.mrb[0].mxu0 %v65
  %v197 = vpop.f32.mrb[0].mxu0
  %v198 = vadd.f32 %v51, %v197
  %v199 = vpop.f32.mrb[0].mxu0
  %v200 = vpop.f32.mrb[0].mxu0
  %v201 = vadd.f32 %v51, %v200
  %v202 = vpop.f32.mrb[0].mxu0
  %203 = vmatprep.mubr.bf16.mxu0 %v157
  %204 = vmatmul.mubr.bf16.gmra.mrb[0].mxu0 %v67
  %v205 = vpop.f32.mrb[0].mxu0
  %v206 = vadd.f32 %v51, %v205
  %v207 = vpop.f32.mrb[0].mxu0
  %v208 = vpop.f32.mrb[0].mxu0
  %v209 = vadd.f32 %v51, %v208
  %v210 = vpop.f32.mrb[0].mxu0
  %211 = vdwg.mxu0
  %212 = vst [vmem:[%s3] sm:$0xff] %v198
  %213 = vst [vmem:[%s3 + $0x8] sm:$0xff] %v201
  %214 = vst [vmem:[%s3 + $0x10] sm:$0xff] %v206
  %215 = vst [vmem:[%s3 + $0x18] sm:$0xff] %v209
  // Predicated region
  $region14: #{conv2d_apply.1} parent=0 // pred_check
    _
  $region15: #{conv2d_apply.1} parent=0 // pred_check_branch
    %217 = sbr.rel (0) target = $region17
  $region16: #{conv2d_apply.1} parent=0 // pred_region
    _
  $region17: #{conv2d_apply.1} parent=0 // pred_fallthru
    _
  // Predicated region
  $region18: #{conv2d_apply.1} parent=0 // pred_check
    _
  $region19: #{conv2d_apply.1} parent=0 // pred_check_branch
    %219 = sbr.rel (0) target = $region21
  $region20: #{conv2d_apply.1} parent=0 // pred_region
    _
  $region21: #{conv2d_apply.1} parent=0 // pred_fallthru
    _

</llo_original>
